<compile_context>
chip_gen: v5e
topology: v5e:2x2
jax: 0.10.0
libtpu: 0.0.40
codegen_flags: <defaults>
</compile_context>

<pallas_src>
import functools

import jax
import jax.numpy as jnp
from jax.experimental import pallas as pl
from jax.experimental.pallas import tpu as pltpu


def _chan_layernorm_kernel(x_ref, g_ref, b_ref, o_ref, *, eps, inv_c):
    # x_ref: (BN, C, TS) tile — channels on sublanes, spatial on lanes.
    x = x_ref[...].astype(jnp.float32)

    # Two-pass mean / population variance over channels. Matches
    # torch.var(dim=1, unbiased=False) to f32 rounding; no cancellation risk.
    mean = jnp.sum(x, axis=1, keepdims=True) * inv_c       # (BN, 1, TS)
    d = x - mean
    var = jnp.sum(d * d, axis=1, keepdims=True) * inv_c    # (BN, 1, TS)
    inv = 1.0 / (jnp.sqrt(var) + eps)                      # exact reciprocal

    g = g_ref[...]   # (C, 1) f32 — broadcasts along lanes (and batch rows)
    b = b_ref[...]
    o_ref[...] = (d * inv * g + b).astype(o_ref.dtype)


def chan_layer_norm(x, g, b, eps=1e-5, target_bytes=2 << 20):
    """x: (N, C, H, W) NCHW; g, b: (1, C, 1, 1). Returns NCHW."""
    N, C, H, W = x.shape
    S = H * W

    # NCHW-native: contiguous (free) reshape — no transpose, no pad.
    x3 = x.reshape(N, C, S)
    g2 = g.reshape(C, 1).astype(jnp.float32)   # pre-cast once in the wrapper
    b2 = b.reshape(C, 1).astype(jnp.float32)

    itemsize = jnp.dtype(x.dtype).itemsize
    row_bytes = C * itemsize                   # bytes per 1-lane column slab

    # ---- spatial (lane) tile: >=512 lanes (>=2 KiB per-channel DMA burst),
    # ~target_bytes per tile, capped so 2x(in)+2x(out) double-buffered tiles
    # stay well under the 32 MiB VMEM limit we request below. ----
    lanes = max(512, (target_bytes // row_bytes) // 128 * 128)
    max_tile_bytes = 6 << 20
    if lanes * row_bytes > max_tile_bytes:
        lanes = max(128, (max_tile_bytes // row_bytes) // 128 * 128)

    if S <= lanes:
        ts = S                                  # whole spatial extent per block
        # Small feature maps: batch-block so each grid step moves ~target_bytes.
        bn = max(1, min(N, target_bytes // max(1, C * S * itemsize)))
    else:
        ts = lanes                              # multiple of 128; ragged tail OK
        bn = 1

    # Guarantee >=2 grid steps so a 2-TensorCore chip (v7x) shards the work.
    if pl.cdiv(N, bn) * pl.cdiv(S, ts) < 2:
        if N >= 2:
            bn = -(-N // 2)                     # ceil(N/2) -> >=2 batch steps
        elif ts == S and S >= 256:
            ts = (S // 2) // 128 * 128          # split spatial instead

    grid = (pl.cdiv(N, bn), pl.cdiv(S, ts))

    kernel = functools.partial(_chan_layernorm_kernel, eps=eps, inv_c=1.0 / C)

    out = pl.pallas_call(
        kernel,
        out_shape=jax.ShapeDtypeStruct((N, C, S), x.dtype),
        grid_spec=pltpu.PrefetchScalarGridSpec(
            num_scalar_prefetch=0,
            grid=grid,
            in_specs=[
                pl.BlockSpec((bn, C, ts), lambda n, s: (n, 0, s)),
                pl.BlockSpec((C, 1), lambda n, s: (0, 0)),  # resident across grid
                pl.BlockSpec((C, 1), lambda n, s: (0, 0)),  # resident across grid
            ],
            out_specs=pl.BlockSpec((bn, C, ts), lambda n, s: (n, 0, s)),
        ),
        compiler_params=pltpu.CompilerParams(
            dimension_semantics=("parallel", "parallel"),
            vmem_limit_bytes=32 << 20,
        ),
    )(x3, g2, b2)

    return out.reshape(N, C, H, W)


def chan_layer_norm_ref(x, g, b, eps=1e-5):
    """Pure-JAX reference matching the PyTorch forward exactly."""
    mean = jnp.mean(x, axis=1, keepdims=True)
    var = jnp.mean((x - mean) ** 2, axis=1, keepdims=True)
    std = jnp.sqrt(var)
    return (x - mean) / (std + eps) * g + b


if __name__ == "__main__":
    key = jax.random.PRNGKey(0)
    k1, k2, k3 = jax.random.split(key, 3)

    N, C, H, W = 2, 4, 16, 16
    x = jax.random.normal(k1, (N, C, H, W), dtype=jnp.float32)
    # Params shaped like nn.Parameter(torch.ones/zeros(1, dim, 1, 1)); perturbed
    # deterministically so the affine path is actually exercised.
    g = 1.0 + 0.1 * jax.random.normal(k2, (1, C, 1, 1), dtype=jnp.float32)
    b = 0.1 * jax.random.normal(k3, (1, C, 1, 1), dtype=jnp.float32)

    y = jax.block_until_ready(chan_layer_norm(x, g, b))
    y_ref = chan_layer_norm_ref(x, g, b)

    assert y.shape == (N, C, H, W)
    assert jnp.allclose(y, y_ref, atol=1e-4, rtol=1e-4), float(
        jnp.max(jnp.abs(y - y_ref))
    )

    print("KERNEL_OK")
</pallas_src>

<mosaic_0001>
module attributes {stable_mosaic.version = 11 : i64} {
  func.func @_chan_layernorm_kernel(%arg0: i32, %arg1: i32, %arg2: memref<1x4x256xf32, #tpu.memory_space<vmem>>, %arg3: memref<4x1xf32, #tpu.memory_space<vmem>>, %arg4: memref<4x1xf32, #tpu.memory_space<vmem>>, %arg5: memref<1x4x256xf32, #tpu.memory_space<vmem>>) attributes {dimension_semantics = [#tpu.dimension_semantics<parallel>, #tpu.dimension_semantics<parallel>], iteration_bounds = array<i64: 2, 1>, scalar_prefetch = 0 : i64, scratch_operands = 0 : i64, tpu.core_type = #tpu.core_type<tc>, window_params = [{transform_indices = @transform_0, window_bounds = array<i64: 1, 4, 256>}, {pipeline_mode = #tpu.pipeline_mode<synchronous>, transform_indices = @transform_1, window_bounds = array<i64: 4, 1>}, {pipeline_mode = #tpu.pipeline_mode<synchronous>, transform_indices = @transform_2, window_bounds = array<i64: 4, 1>}, {transform_indices = @transform_3, window_bounds = array<i64: 1, 4, 256>}]} {
    %c0 = arith.constant 0 : index
    %c0_0 = arith.constant 0 : index
    %c0_1 = arith.constant 0 : index
    %0 = vector.load %arg2[%c0, %c0_0, %c0_1] : memref<1x4x256xf32, #tpu.memory_space<vmem>>, vector<1x4x256xf32>
    %cst = arith.constant dense<0.000000e+00> : vector<1x256xf32>
    %1 = vector.multi_reduction <add>, %0, %cst [1] : vector<1x4x256xf32> to vector<1x256xf32>
    %2 = vector.shape_cast %1 : vector<1x256xf32> to vector<1x1x256xf32>
    %cst_2 = arith.constant 2.500000e-01 : f32
    %3 = vector.broadcast %cst_2 : f32 to vector<1x1x256xf32>
    %4 = arith.mulf %2, %3 : vector<1x1x256xf32>
    %5 = vector.broadcast %4 : vector<1x1x256xf32> to vector<1x4x256xf32>
    %6 = arith.subf %0, %5 : vector<1x4x256xf32>
    %7 = arith.mulf %6, %6 : vector<1x4x256xf32>
    %cst_3 = arith.constant dense<0.000000e+00> : vector<1x256xf32>
    %8 = vector.multi_reduction <add>, %7, %cst_3 [1] : vector<1x4x256xf32> to vector<1x256xf32>
    %9 = vector.shape_cast %8 : vector<1x256xf32> to vector<1x1x256xf32>
    %cst_4 = arith.constant 2.500000e-01 : f32
    %10 = vector.broadcast %cst_4 : f32 to vector<1x1x256xf32>
    %11 = arith.mulf %9, %10 : vector<1x1x256xf32>
    %12 = math.sqrt %11 : vector<1x1x256xf32>
    %cst_5 = arith.constant 9.99999974E-6 : f32
    %13 = vector.broadcast %cst_5 : f32 to vector<1x1x256xf32>
    %14 = arith.addf %12, %13 : vector<1x1x256xf32>
    %cst_6 = arith.constant 1.000000e+00 : f32
    %15 = vector.broadcast %cst_6 : f32 to vector<1x1x256xf32>
    %16 = arith.divf %15, %14 : vector<1x1x256xf32>
    %c0_7 = arith.constant 0 : index
    %c0_8 = arith.constant 0 : index
    %17 = vector.load %arg3[%c0_7, %c0_8] : memref<4x1xf32, #tpu.memory_space<vmem>>, vector<4x1xf32>
    %c0_9 = arith.constant 0 : index
    %c0_10 = arith.constant 0 : index
    %18 = vector.load %arg4[%c0_9, %c0_10] : memref<4x1xf32, #tpu.memory_space<vmem>>, vector<4x1xf32>
    %19 = vector.broadcast %16 : vector<1x1x256xf32> to vector<1x4x256xf32>
    %20 = arith.mulf %6, %19 : vector<1x4x256xf32>
    %21 = vector.shape_cast %17 : vector<4x1xf32> to vector<1x4x1xf32>
    %22 = vector.broadcast %21 : vector<1x4x1xf32> to vector<1x4x256xf32>
    %23 = arith.mulf %20, %22 : vector<1x4x256xf32>
    %24 = vector.shape_cast %18 : vector<4x1xf32> to vector<1x4x1xf32>
    %25 = vector.broadcast %24 : vector<1x4x1xf32> to vector<1x4x256xf32>
    %26 = arith.addf %23, %25 : vector<1x4x256xf32>
    %c0_11 = arith.constant 0 : index
    %c0_12 = arith.constant 0 : index
    %c0_13 = arith.constant 0 : index
    %27 = vector.load %arg5[%c0_11, %c0_12, %c0_13] : memref<1x4x256xf32, #tpu.memory_space<vmem>>, vector<1x4x256xf32>
    tpu.vector_store %arg5[%c0_11, %c0_12, %c0_13], %26 {strides = array<i32>} : memref<1x4x256xf32, #tpu.memory_space<vmem>>, vector<1x4x256xf32>,
    return
  }
  func.func @transform_0(%arg0: i32, %arg1: i32) -> (i32, i32, i32) {
    %c0_i32 = arith.constant 0 : i32
    %c0_i32_0 = arith.constant 0 : i32
    return %arg0, %c0_i32, %arg1 : i32, i32, i32
  }
  func.func @transform_1(%arg0: i32, %arg1: i32) -> (i32, i32) {
    %c0_i32 = arith.constant 0 : i32
    %c0_i32_0 = arith.constant 0 : i32
    %c0_i32_1 = arith.constant 0 : i32
    return %c0_i32, %c0_i32_0 : i32, i32
  }
  func.func @transform_2(%arg0: i32, %arg1: i32) -> (i32, i32) {
    %c0_i32 = arith.constant 0 : i32
    %c0_i32_0 = arith.constant 0 : i32
    %c0_i32_1 = arith.constant 0 : i32
    return %c0_i32, %c0_i32_0 : i32, i32
  }
  func.func @transform_3(%arg0: i32, %arg1: i32) -> (i32, i32, i32) {
    %c0_i32 = arith.constant 0 : i32
    %c0_i32_0 = arith.constant 0 : i32
    return %arg0, %c0_i32, %arg1 : i32, i32, i32
  }
}

</mosaic_0001>

<llo_original>
// kernel: tpu_custom_call.1
$region0: #{tpu_custom_call.1}
  #allocation0 [shape = 'u32[]', space=smem, size = 0x4, offset = 0x4, fixed_abs, tag = 'smem constant byte address 0x4 - core index']
  #allocation1 [shape = 'u32[72,128]{1,0:T(1,128)}', space=vmem, size = 0x9000, scoped, tag = 'internal scratch']
  %s0 = inlined_call_operand.hbm [shape: f32[2,4,256], index: 0, kind: input, shape index: {}]
  %s1 = inlined_call_operand.vmem [shape: f32[4,1], index: 1, kind: input, shape index: {}]
  %s2 = inlined_call_operand.vmem [shape: f32[4,1], index: 2, kind: input, shape index: {}]
  %s3 = inlined_call_operand.hbm [shape: f32[2,4,256], index: 3, kind: output, shape index: {}]
  %s4 = sld [smem:[#allocation0]]
  $region49: #{tpu_custom_call.1} parent=0
    _
  %s6 = ssub.s32 1, %s4
  %s7 = scalar_select 0, %s6, %s4
  $region1: #{tpu_custom_call.1} parent=0
    #allocation2 [shape = 'u8[8192]{0}', space=vmem, size = 0x2000, scoped, tag = 'input window, operand 0']
    #allocation3 [shape = 's32[2]{0}', space=sflag, size = 0x8, scoped, tag = 'scoped memory for tpu_custom_call.1']
    #allocation4 [shape = 's32[2]{0}', space=sflag, size = 0x8, scoped, tag = 'scoped memory for tpu_custom_call.1']
    #allocation5 [shape = 'u8[8192]{0}', space=vmem, size = 0x2000, scoped, tag = 'output window, operand 0']
    %8 = vsyncpa [#allocation3], 0
    %s9 = scalar_lea.sflag [#allocation3], 1
    %10 = vsyncpa %s9, 0
    %11 = vsyncpa [#allocation4], 0
    %s12 = scalar_lea.sflag [#allocation4], 1
    %13 = vsyncpa %s12, 0
    loop: start=0, step=1, limit=4
    $region2: #{tpu_custom_call.1} parent=1 // loop_pre_header
      _
    $region3: #{tpu_custom_call.1} parent=1 // loop_header
      %s15 = sphi 0, %s19
      %p16 = scmp.ge.s32.totalorder %s15, 4
      %s22 = sphi 0, %s34
      %s23 = sphi 0, %s30
      %s24 = sphi 0, %s22
      %s25 = sphi 0, %s23
      %s26 = sphi 0, %s24
      %s27 = sphi 0, %s25
      %s39 = sphi 0, %s41
      %s42 = sphi 0, %s39
      %s43 = sphi 0, %s42
      %s59 = sphi 0, %s43
      %s63 = sphi 0, %s63
      %s65 = sphi 0, %s63
      %s66 = sphi 0, %s65
      %s80 = sphi 0, %s66
      %s84 = sphi 0, %s84
      %s86 = sphi 0, %s84
      %s87 = sphi 0, %s86
      %s101 = sphi 0, %s87
      %s109 = sphi 0, %s111
      %s112 = sphi 0, %s109
      %s113 = sphi 0, %s112
      %s129 = sphi 0, %s113
    $region4: #{tpu_custom_call.1} parent=1 // loop_header_branch
      %18 = sbr.rel (%p16) target = $region8
    $region5: #{tpu_custom_call.1} parent=1 // loop_body
      %s20 = ssub.s32 %s15, 1
      %s21 = ssub.s32 %s15, 2
      %s28 = sadd.s32 1, %s23
      %p29 = scmp.ge.s32.totalorder %s28, 1
      %s30 = scalar_select %p29, 0, %s28
      %s31 = sadd.s32 1, %s22
      %s32 = scalar_select %p29, %s31, %s22
      %p33 = scmp.ge.s32.totalorder %s32, 2
      %s34 = scalar_select %p33, 0, %s32
      %s35 = ssub.s32 %s22, %s34
      %s36 = ssub.s32 %s23, %s30
      %s37 = sor.u32 %s35, %s36
      %p38 = scmp.eq.s32.totalorder %s37, 0
      %s40 = sadd.s32 %s39, 1
      %s41 = scalar_select %p38, %s39, %s40
      %p44 = pneg %p38
      %p45 = scmp.eq.s32.totalorder %s15, 1
      %p46 = por %p44, %p45
      %p47 = scmp.ne.s32.totalorder %s39, %s42
      %p48 = scmp.eq.s32.totalorder %s15, 0
      %p49 = por %p47, %p48
      %p50 = scmp.ne.s32.totalorder %s39, %s42
      %p51 = scmp.eq.s32.totalorder %s20, 1
      %p52 = por %p50, %p51
      %p53 = scmp.ne.s32.totalorder %s42, %s43
      %p54 = scmp.eq.s32.totalorder %s20, 0
      %p55 = por %p53, %p54
      %p56 = scmp.ne.s32.totalorder %s42, %s43
      %p57 = scmp.eq.s32.totalorder %s21, 1
      %p58 = por %p56, %p57
      %p60 = scmp.ne.s32.totalorder %s43, %s59
      %p61 = scmp.eq.s32.totalorder %s21, 0
      %p62 = por %p60, %p61
      %s64 = sadd.s32 %s63, 1
      %p67 = scmp.eq.s32.totalorder %s15, 1
      %p68 = scmp.ne.s32.totalorder %s63, %s65
      %p69 = scmp.eq.s32.totalorder %s15, 0
      %p70 = por %p68, %p69
      %p71 = scmp.ne.s32.totalorder %s63, %s65
      %p72 = scmp.eq.s32.totalorder %s20, 1
      %p73 = por %p71, %p72
      %p74 = scmp.ne.s32.totalorder %s65, %s66
      %p75 = scmp.eq.s32.totalorder %s20, 0
      %p76 = por %p74, %p75
      %p77 = scmp.ne.s32.totalorder %s65, %s66
      %p78 = scmp.eq.s32.totalorder %s21, 1
      %p79 = por %p77, %p78
      %p81 = scmp.ne.s32.totalorder %s66, %s80
      %p82 = scmp.eq.s32.totalorder %s21, 0
      %p83 = por %p81, %p82
      %s85 = sadd.s32 %s84, 1
      %p88 = scmp.eq.s32.totalorder %s15, 1
      %p89 = scmp.ne.s32.totalorder %s84, %s86
      %p90 = scmp.eq.s32.totalorder %s15, 0
      %p91 = por %p89, %p90
      %p92 = scmp.ne.s32.totalorder %s84, %s86
      %p93 = scmp.eq.s32.totalorder %s20, 1
      %p94 = por %p92, %p93
      %p95 = scmp.ne.s32.totalorder %s86, %s87
      %p96 = scmp.eq.s32.totalorder %s20, 0
      %p97 = por %p95, %p96
      %p98 = scmp.ne.s32.totalorder %s86, %s87
      %p99 = scmp.eq.s32.totalorder %s21, 1
      %p100 = por %p98, %p99
      %p102 = scmp.ne.s32.totalorder %s87, %s101
      %p103 = scmp.eq.s32.totalorder %s21, 0
      %p104 = por %p102, %p103
      %s105 = ssub.s32 %s22, %s34
      %s106 = ssub.s32 %s23, %s30
      %s107 = sor.u32 %s105, %s106
      %p108 = scmp.eq.s32.totalorder %s107, 0
      %s110 = sadd.s32 %s109, 1
      %s111 = scalar_select %p108, %s109, %s110
      %p114 = pneg %p108
      %p115 = scmp.eq.s32.totalorder %s15, 1
      %p116 = por %p114, %p115
      %p117 = scmp.ne.s32.totalorder %s109, %s112
      %p118 = scmp.eq.s32.totalorder %s15, 0
      %p119 = por %p117, %p118
      %p120 = scmp.ne.s32.totalorder %s109, %s112
      %p121 = scmp.eq.s32.totalorder %s20, 1
      %p122 = por %p120, %p121
      %p123 = scmp.ne.s32.totalorder %s112, %s113
      %p124 = scmp.eq.s32.totalorder %s20, 0
      %p125 = por %p123, %p124
      %p126 = scmp.ne.s32.totalorder %s112, %s113
      %p127 = scmp.eq.s32.totalorder %s21, 1
      %p128 = por %p126, %p127
      %p130 = scmp.ne.s32.totalorder %s113, %s129
      %p131 = scmp.eq.s32.totalorder %s21, 0
      %p132 = por %p130, %p131
      %p133 = scmp.le.s32.totalorder 1, %s15
      %p134 = scmp.lt.s32.totalorder %s15, 3
      %p135 = pnand %p133, %p134
      %p136 = pneg %p135
      // Predicated region
      $region9: #{tpu_custom_call.1} parent=5 // pred_check
        _
      $region10: #{tpu_custom_call.1} parent=5 // pred_check_branch
        %138 = sbr.rel (%p135) target = $region12
      $region11: #{tpu_custom_call.1} parent=5 // pred_region
        %s139 = ssub.s32 %s15, 1
        // Predicated region
        $region13: #{tpu_custom_call.1} parent=11 // pred_check
          %p140 = pneg %p76
        $region14: #{tpu_custom_call.1} parent=11 // pred_check_branch
          %142 = sbr.rel (%p140) target = $region16
        $region15: #{tpu_custom_call.1} parent=11 // pred_region
          _
        $region16: #{tpu_custom_call.1} parent=11 // pred_fallthru
          _
        // Predicated region
        $region17: #{tpu_custom_call.1} parent=11 // pred_check
          %p143 = pneg %p97
        $region18: #{tpu_custom_call.1} parent=11 // pred_check_branch
          %145 = sbr.rel (%p143) target = $region20
        $region19: #{tpu_custom_call.1} parent=11 // pred_region
          _
        $region20: #{tpu_custom_call.1} parent=11 // pred_fallthru
          _
      $region12: #{tpu_custom_call.1} parent=5 // pred_fallthru
        _
      %p146 = scmp.lt.s32.totalorder %s15, 2
      // Predicated region
      $region21: #{tpu_custom_call.1} parent=5 // pred_check
        %p147 = pneg %p146
      $region22: #{tpu_custom_call.1} parent=5 // pred_check_branch
        %149 = sbr.rel (%p147) target = $region24
      $region23: #{tpu_custom_call.1} parent=5 // pred_region
        // Predicated region
        $region25: #{tpu_custom_call.1} parent=23 // pred_check
          %p150 = pneg %p49
        $region26: #{tpu_custom_call.1} parent=23 // pred_check_branch
          %152 = sbr.rel (%p150) target = $region28
        $region27: #{tpu_custom_call.1} parent=23 // pred_region
          %s153 = sand.u32 %s39, 1
          %s154 = scalar_lea.sflag [#allocation3], %s153
          %s155 = sand.u32 %s39, 1
          %s156 = smul.addr %s155, 8
          %s157 = scalar_lea.vmem [#allocation2], %s156
          %s158 = smul.u32 2, %s23
          %160 = vsyncadd %s154, 0
          %s161 = smul.addr %s22, 2
          %s162 = sadd.s32 %s158, %s161
          %s163 = smul.addr %s162, 4
          %s164 = scalar_lea.hbm %s0, %s163
          %s166 = sshll.u32 %s164, 4
          %s167 = int_to_ptr.hbm [resolvable:$true] %s166
          %s168 = sshll.u32 %s157, 4
          %s169 = int_to_ptr.vmem [resolvable:$true] %s168
          %171 = dma.hbm_to_vmem [thread:$0]  %s167, 128, %s169, %s154
        $region28: #{tpu_custom_call.1} parent=23 // pred_fallthru
          _
      $region24: #{tpu_custom_call.1} parent=5 // pred_fallthru
        _
      %p172 = scmp.le.s32.totalorder 1, %s15
      %p173 = scmp.lt.s32.totalorder %s15, 3
      %p174 = pnand %p172, %p173
      %p175 = pneg %p174
      // Predicated region
      $region29: #{tpu_custom_call.1} parent=5 // pred_check
        _
      $region30: #{tpu_custom_call.1} parent=5 // pred_check_branch
        %177 = sbr.rel (%p174) target = $region32
      $region31: #{tpu_custom_call.1} parent=5 // pred_region
        %s178 = ssub.s32 %s15, 1
        %s179 = sand.u32 %s42, 1
        %s180 = scalar_lea.sflag [#allocation3], %s179
        %s181 = sand.u32 %s42, 1
        %s182 = smul.addr %s181, 8
        %s183 = scalar_lea.vmem [#allocation2], %s182
        // Predicated region
        $region33: #{tpu_custom_call.1} parent=31 // pred_check
          %p184 = pneg %p55
        $region34: #{tpu_custom_call.1} parent=31 // pred_check_branch
          %186 = sbr.rel (%p184) target = $region36
        $region35: #{tpu_custom_call.1} parent=31 // pred_region
          %188 = dma.done %s180, 128
        $region36: #{tpu_custom_call.1} parent=31 // pred_fallthru
          _
        %s189 = sand.u32 %s42, 1
        %s190 = scalar_lea.sflag [#allocation3], %s189
        %s191 = sand.u32 %s42, 1
        %s192 = smul.addr %s191, 8
        %s193 = scalar_lea.vmem [#allocation2], %s192
        %p194 = pneg %p55
        %p195 = pneg %p52
        %p196 = pneg %p76
        %p197 = pneg %p73
        %p198 = pneg %p97
        %p199 = pneg %p94
        %p200 = pneg %p125
        %p201 = pneg %p122
        %s202 = sand.u32 %s112, 1
        %s203 = scalar_lea.sflag [#allocation4], %s202
        %s204 = sand.u32 %s112, 1
        %s205 = smul.addr %s204, 8
        %s206 = scalar_lea.vmem [#allocation5], %s205
        %s207 = smul.u32 2, %s25
        %s208 = smul.u32 2, %s25
        %v209 = vld [vmem:[%s183] sm:$0xff]
        %211 = vst [vmem:[#allocation1] ss:$2 sm:$0xff] %v209
        %v212 = vld.sshfl [vmem:[#allocation1] sm:$0xff pattern:$0x75316420]
        %v213 = vld.sshfl [vmem:[#allocation1 + $0x8] sm:$0xff pattern:$0x75316420]
        %vm216 = vcmask 1043456
        %v217 = vsel %vm216, %v212, 0.0
        %v218 = vrot.slane %v217, 4
        %v219 = vadd.f32 %v217, %v218
        %v220 = vrot.slane %v219, 2
        %v221 = vadd.f32 %v219, %v220
        %v222 = vrot.slane %v221, 1
        %v223 = vadd.f32 %v221, %v222
        %v224 = vsel %vm216, %v213, 0.0
        %v225 = vrot.slane %v224, 4
        %v226 = vadd.f32 %v224, %v225
        %v227 = vrot.slane %v226, 2
        %v228 = vadd.f32 %v226, %v227
        %v229 = vrot.slane %v228, 1
        %v230 = vadd.f32 %v228, %v229
        %v231 = vmul.f32 %v223, 0.25
        %v232 = vmul.f32 %v230, 0.25
        %v235 = vrot.slane %v232, 4
        %v236 = vsel %vm216, %v231, %v235
        %v238 = vsub.f32 %v209, %v236
        %v239 = vmul.f32 %v238, %v238
        %241 = vst [vmem:[#allocation1] ss:$2 sm:$0xff] %v239
        %v242 = vld.sshfl [vmem:[#allocation1] sm:$0xff pattern:$0x75316420]
        %v243 = vld.sshfl [vmem:[#allocation1 + $0x8] sm:$0xff pattern:$0x75316420]
        %v246 = vsel %vm216, %v242, 0.0
        %v247 = vrot.slane %v246, 4
        %v248 = vadd.f32 %v246, %v247
        %v249 = vrot.slane %v248, 2
        %v250 = vadd.f32 %v248, %v249
        %v251 = vrot.slane %v250, 1
        %v252 = vadd.f32 %v250, %v251
        %v253 = vsel %vm216, %v243, 0.0
        %v254 = vrot.slane %v253, 4
        %v255 = vadd.f32 %v253, %v254
        %v256 = vrot.slane %v255, 2
        %v257 = vadd.f32 %v255, %v256
        %v258 = vrot.slane %v257, 1
        %v259 = vadd.f32 %v257, %v258
        %v260 = vmul.f32 %v252, 0.25
        %v261 = vmul.f32 %v259, 0.25
        %v262 = vrsqrt.pop %v260
        %v263 = vmul.f32 %v262, %v260
        %v264 = vmul.f32 %v263, %v262
        %v265 = vmul.f32 0.5, %v264
        %v266 = vsub.f32 1.5, %v265
        %v267 = vmul.f32 %v262, %v266
        %v268 = vmul.f32 %v260, %v267
        %vm269 = vcmp.eq.f32.partialorder %v260, inf
        %v270 = vsel %vm269, %v260, %v268
        %vm271 = vcmp.eq.f32.partialorder %v260, 0.0
        %v272 = vand.u32 %v260, 2147483648
        %v273 = vsel %vm271, %v272, %v270
        %v274 = vrsqrt.pop %v261
        %v275 = vmul.f32 %v274, %v261
        %v276 = vmul.f32 %v275, %v274
        %v277 = vmul.f32 0.5, %v276
        %v278 = vsub.f32 1.5, %v277
        %v279 = vmul.f32 %v274, %v278
        %v280 = vmul.f32 %v261, %v279
        %vm281 = vcmp.eq.f32.partialorder %v261, inf
        %v282 = vsel %vm281, %v261, %v280
        %vm283 = vcmp.eq.f32.partialorder %v261, 0.0
        %v284 = vand.u32 %v261, 2147483648
        %v285 = vsel %vm283, %v284, %v282
        %v286 = vadd.f32 %v273, 1e-05
        %v287 = vadd.f32 %v285, 1e-05
        %v288 = vrcp.pop %v286
        %v289 = vmul.f32 %v286, %v288
        %v290 = vsub.f32 1.0, %v289
        %v291 = vmul.f32 %v288, %v290
        %v292 = vadd.f32 %v288, %v291
        %vm293 = vweird.f32 %v286
        %vm294 = vweird.f32 %v288
        %vm295 = vmor %vm293, %vm294
        %v296 = vsel %vm295, %v288, %v292
        %v297 = vand.u32 2147483647, %v286
        %vm298 = vcmp.eq.f32.partialorder %v297, 8.507059e+37
        %v299 = vand.u32 %v286, 2147483648
        %v300 = vor.u32 1.1754944e-38, %v299
        %v301 = vsel %vm298, %v300, %v296
        %v302 = vmul.f32 1.0, %v301
        %v303 = vrcp.pop %v287
        %v304 = vmul.f32 %v287, %v303
        %v305 = vsub.f32 1.0, %v304
        %v306 = vmul.f32 %v303, %v305
        %v307 = vadd.f32 %v303, %v306
        %vm308 = vweird.f32 %v287
        %vm309 = vweird.f32 %v303
        %vm310 = vmor %vm308, %vm309
        %v311 = vsel %vm310, %v303, %v307
        %v312 = vand.u32 2147483647, %v287
        %vm313 = vcmp.eq.f32.partialorder %v312, 8.507059e+37
        %v314 = vand.u32 %v287, 2147483648
        %v315 = vor.u32 1.1754944e-38, %v314
        %v316 = vsel %vm313, %v315, %v311
        %v317 = vmul.f32 1.0, %v316
        %v318 = vld [vmem:[%s1] sm:$0xf]
        %v319 = vld [vmem:[%s2] sm:$0xf]
        %v322 = vrot.slane %v317, 4
        %v323 = vsel %vm216, %v302, %v322
        %v325 = vmul.f32 %v238, %v323
        %327 = vset.pattern.permute.xlu0 0
        %328 = vperm.xlu0 %327, %v318
        %v329 = vpop.permute.xlu0 %328
        %v331 = vunpack.c.l.s4 839922192
        %v332 = vunpack.c.0.s8 %v331
        %v333 = vperm.slane %v329, %v332
        %v335 = vmul.f32 %v325, %v333
        %337 = vset.pattern.permute.xlu0 0
        %338 = vperm.xlu0 %337, %v319
        %v339 = vpop.permute.xlu0 %338
        %v341 = vunpack.c.l.s4 839922192
        %v342 = vunpack.c.0.s8 %v341
        %v343 = vperm.slane %v339, %v342
        %v345 = vadd.f32 %v335, %v343
        %346 = vst [vmem:[%s206] sm:$0xff] %v345
        %s347 = sand.u32 %s112, 1
        %s348 = scalar_lea.sflag [#allocation4], %s347
        %s349 = sand.u32 %s112, 1
        %s350 = smul.addr %s349, 8
        %s351 = scalar_lea.vmem [#allocation5], %s350
        // Predicated region
        $region37: #{tpu_custom_call.1} parent=31 // pred_check
          %p352 = pneg %p122
        $region38: #{tpu_custom_call.1} parent=31 // pred_check_branch
          %354 = sbr.rel (%p352) target = $region40
        $region39: #{tpu_custom_call.1} parent=31 // pred_region
          %s355 = smul.u32 2, %s25
          %357 = vsyncadd %s348, 0
          %s358 = smul.addr %s24, 2
          %s359 = sadd.s32 %s355, %s358
          %s360 = smul.addr %s359, 4
          %s361 = scalar_lea.hbm %s3, %s360
          %s363 = sshll.u32 %s351, 4
          %s364 = int_to_ptr.vmem [resolvable:$true] %s363
          %s365 = sshll.u32 %s361, 4
          %s366 = int_to_ptr.hbm [resolvable:$true] %s365
          %368 = dma.vmem_to_hbm [thread:$0]  %s364, 128, %s366, %s348
        $region40: #{tpu_custom_call.1} parent=31 // pred_fallthru
          _
      $region32: #{tpu_custom_call.1} parent=5 // pred_fallthru
        _
      %p369 = scmp.le.s32.totalorder 2, %s15
      // Predicated region
      $region41: #{tpu_custom_call.1} parent=5 // pred_check
        %p370 = pneg %p369
      $region42: #{tpu_custom_call.1} parent=5 // pred_check_branch
        %372 = sbr.rel (%p370) target = $region44
      $region43: #{tpu_custom_call.1} parent=5 // pred_region
        %s373 = ssub.s32 %s15, 2
        // Predicated region
        $region45: #{tpu_custom_call.1} parent=43 // pred_check
          %p374 = pneg %p128
        $region46: #{tpu_custom_call.1} parent=43 // pred_check_branch
          %376 = sbr.rel (%p374) target = $region48
        $region47: #{tpu_custom_call.1} parent=43 // pred_region
          %s377 = sand.u32 %s113, 1
          %s378 = scalar_lea.sflag [#allocation4], %s377
          %s379 = sand.u32 %s113, 1
          %s380 = smul.addr %s379, 8
          %s381 = scalar_lea.vmem [#allocation5], %s380
          %383 = dma.done %s378, 128
        $region48: #{tpu_custom_call.1} parent=43 // pred_fallthru
          _
      $region44: #{tpu_custom_call.1} parent=5 // pred_fallthru
        _
    $region6: #{tpu_custom_call.1} parent=1 // loop_footer
      %s19 = sadd.s32 1, %s15
    $region7: #{tpu_custom_call.1} parent=1 // loop_footer_branch
      %14 = sbr.rel target = $region3
    $region8: #{tpu_custom_call.1} parent=1 // loop_exit
      _
    %384 = vsyncpa [#allocation3], 1
    %s385 = scalar_lea.sflag [#allocation3], 1
    %386 = vsyncpa %s385, 1
    %387 = vsyncpa [#allocation4], 1
    %s388 = scalar_lea.sflag [#allocation4], 1
    %389 = vsyncpa %s388, 1

</llo_original>
